<compile_context>
chip_gen: v7x
topology: tpu7x:2x2x1
jax: 0.10.0
libtpu: 0.0.40
codegen_flags: <defaults>
</compile_context>

<pallas_src>
import functools

import jax
import jax.numpy as jnp
from jax.experimental import pallas as pl
from jax.experimental.pallas import tpu as pltpu


# ----------------------------------------------------------------------------
# Fused GCN kernel: grid = (2 branches, B graphs); all layers in one body.
# ----------------------------------------------------------------------------
def gcn_fused_kernel(feat_ref, adj_ref, w1_ref, wr_ref, b_ref, alpha_ref,
                     h_ref, g_ref):
    g = pl.program_id(0)                       # which branch (adj / diff)
    num_layers = b_ref.shape[1]
    in_ft0 = w1_ref.shape[1]
    n_h = w1_ref.shape[2]

    a = adj_ref[0, 0].astype(jnp.bfloat16)     # (N, N)
    h = feat_ref[0].astype(jnp.bfloat16)       # (N, F)
    b_all = b_ref[0]                           # (L, H) f32

    sums = []
    o = None
    for l in range(num_layers):
        w = w1_ref[0] if l == 0 else wr_ref[0, l - 1]          # bf16 weights
        in_ft = in_ft0 if l == 0 else n_h
        if in_ft < n_h:
            # (adj @ X) @ W : fewer FLOPs when in_ft < out_ft
            t = jnp.dot(a, h, preferred_element_type=jnp.float32)
            o = jnp.dot(t.astype(jnp.bfloat16), w,
                        preferred_element_type=jnp.float32)
        else:
            # adj @ (X @ W) : matches module order
            t = jnp.dot(h, w, preferred_element_type=jnp.float32)
            o = jnp.dot(a, t.astype(jnp.bfloat16),
                        preferred_element_type=jnp.float32)
        o = o + b_all[l:l + 1, :]                              # + bias (1, H)
        alpha = alpha_ref[g, l]                                # PReLU slope
        o = jnp.where(o > 0, o, alpha * o)
        sums.append(jnp.sum(o, axis=0, keepdims=True))         # (1, H) readout
        h = o.astype(jnp.bfloat16)

    h_ref[0, 0] = o.astype(h_ref.dtype)
    g_ref[0, 0] = jnp.concatenate(sums, axis=-1).astype(g_ref.dtype)


def gcn_forward_dual(feat, adj, diff, gp1, gp2):
    """Run gnn1(feat, adj) and gnn2(feat, diff) in one pallas_call.

    Returns h_all (2, B, N, H) and g_all (2, B, L*H).
    """
    B, N, F = feat.shape
    w1s = jnp.stack([gp1[0], gp2[0]])          # (2, F, H)      bf16
    wrs = jnp.stack([gp1[1], gp2[1]])          # (2, L-1|1, H, H) bf16
    bst = jnp.stack([gp1[2], gp2[2]])          # (2, L, H)      f32
    als = jnp.stack([gp1[3], gp2[3]])          # (2, L)         f32
    ast = jnp.stack([adj, diff])               # (2, B, N, N)

    L = bst.shape[1]
    H = w1s.shape[-1]
    n_rest = wrs.shape[1]

    h_out, g_out = pl.pallas_call(
        gcn_fused_kernel,
        out_shape=(
            jax.ShapeDtypeStruct((2, B, N, H), jnp.float32),
            jax.ShapeDtypeStruct((2, B, 1, L * H), jnp.float32),
        ),
        grid=(2, B),
        in_specs=[
            pl.BlockSpec((1, N, F), lambda g, b: (b, 0, 0)),          # feat
            pl.BlockSpec((1, 1, N, N), lambda g, b: (g, b, 0, 0)),    # adj/diff
            pl.BlockSpec((1, F, H), lambda g, b: (g, 0, 0)),          # W layer 1
            pl.BlockSpec((1, n_rest, H, H), lambda g, b: (g, 0, 0, 0)),
            pl.BlockSpec((1, L, H), lambda g, b: (g, 0, 0)),          # biases
            pl.BlockSpec(memory_space=pltpu.MemorySpace.SMEM),        # alphas
        ],
        out_specs=(
            pl.BlockSpec((1, 1, N, H), lambda g, b: (g, b, 0, 0)),
            pl.BlockSpec((1, 1, 1, L * H), lambda g, b: (g, b, 0, 0)),
        ),
        compiler_params=pltpu.CompilerParams(
            dimension_semantics=("parallel", "parallel")),
    )(feat, ast, w1s, wrs, bst, als)
    return h_out, g_out[:, :, 0, :]


# ----------------------------------------------------------------------------
# Fused MLP kernel: [Linear|shortcut] fused first matmul, PReLU x3, + shortcut.
# Row-tiled grid so large M never exceeds VMEM; rows shard across cores.
# ----------------------------------------------------------------------------
def mlp_kernel(h_dim, x_ref, w1s_ref, b1s_ref, w2_ref, b2_ref, w3_ref, b3_ref,
               alpha_ref, out_ref):
    x = x_ref[...].astype(jnp.bfloat16)
    # One matmul for ffn-layer-1 and the linear shortcut (shared LHS).
    hs = jnp.dot(x, w1s_ref[...], preferred_element_type=jnp.float32) + b1s_ref[...]
    h = hs[:, :h_dim]
    sc = hs[:, h_dim:]
    h = jnp.where(h > 0, h, alpha_ref[0, 0] * h)
    h = jnp.dot(h.astype(jnp.bfloat16), w2_ref[...],
                preferred_element_type=jnp.float32) + b2_ref[...]
    h = jnp.where(h > 0, h, alpha_ref[0, 1] * h)
    h = jnp.dot(h.astype(jnp.bfloat16), w3_ref[...],
                preferred_element_type=jnp.float32) + b3_ref[...]
    h = jnp.where(h > 0, h, alpha_ref[0, 2] * h)
    out_ref[...] = (h + sc).astype(out_ref.dtype)


def mlp_apply(x, params, tile_m=512):
    w1s, b1s, w2, b2, w3, b3, alphas = params
    M, Fin = x.shape
    H = w2.shape[0]

    # Pad rows so every block is exact (multiple of 8 sublanes / of the tile).
    tm = min(tile_m, ((M + 7) // 8) * 8)
    Mp = pl.cdiv(M, tm) * tm
    if Mp != M:
        x = jnp.pad(x, ((0, Mp - M), (0, 0)))

    kern = functools.partial(mlp_kernel, H)
    out = pl.pallas_call(
        kern,
        out_shape=jax.ShapeDtypeStruct((Mp, H), jnp.float32),
        grid=(Mp // tm,),
        in_specs=[
            pl.BlockSpec((tm, Fin), lambda i: (i, 0)),
            pl.BlockSpec((Fin, 2 * H), lambda i: (0, 0)),
            pl.BlockSpec((1, 2 * H), lambda i: (0, 0)),
            pl.BlockSpec((H, H), lambda i: (0, 0)),
            pl.BlockSpec((1, H), lambda i: (0, 0)),
            pl.BlockSpec((H, H), lambda i: (0, 0)),
            pl.BlockSpec((1, H), lambda i: (0, 0)),
            pl.BlockSpec(memory_space=pltpu.MemorySpace.SMEM),
        ],
        out_specs=pl.BlockSpec((tm, H), lambda i: (i, 0)),
        compiler_params=pltpu.CompilerParams(dimension_semantics=("parallel",)),
    )(x, w1s, b1s, w2, b2, w3, b3, alphas)
    return out[:M]


# ----------------------------------------------------------------------------
# Parameter construction (deterministic, xavier-uniform style).
# Weights stored bf16 (MXU inputs); biases / PReLU slopes in f32.
# ----------------------------------------------------------------------------
def xavier(key, fan_in, fan_out):
    bound = (6.0 / (fan_in + fan_out)) ** 0.5
    return jax.random.uniform(key, (fan_in, fan_out), jnp.float32, -bound, bound)


def make_gcn_params(key, n_in, n_h, num_layers):
    key, k0 = jax.random.split(key)
    w1 = xavier(k0, n_in, n_h).astype(jnp.bfloat16)
    n_rest = max(1, num_layers - 1)
    wr_list = []
    for i in range(n_rest):
        key, k = jax.random.split(key)
        if i < num_layers - 1:
            wr_list.append(xavier(k, n_h, n_h).astype(jnp.bfloat16))
        else:  # dummy slot when num_layers == 1 (never read by the kernel)
            wr_list.append(jnp.zeros((n_h, n_h), jnp.bfloat16))
    wr = jnp.stack(wr_list)                                   # (n_rest, H, H)
    b = jnp.zeros((num_layers, n_h), jnp.float32)             # bias init 0
    alpha = jnp.full((num_layers,), 0.25, jnp.float32)        # PReLU init
    return (w1, wr, b, alpha), key


def make_mlp_params(key, in_ft, out_ft):
    def linear(key, fi, fo):
        key, kw, kb = jax.random.split(key, 3)
        w = xavier(kw, fi, fo)
        bound = 1.0 / (fi ** 0.5)
        b = jax.random.uniform(kb, (1, fo), jnp.float32, -bound, bound)
        return key, w, b

    key, w1, b1 = linear(key, in_ft, out_ft)
    key, w2, b2 = linear(key, out_ft, out_ft)
    key, w3, b3 = linear(key, out_ft, out_ft)
    key, ws, bs = linear(key, in_ft, out_ft)
    # Fuse ffn layer-1 and the shortcut (shared LHS) into one weight/bias.
    w1s = jnp.concatenate([w1, ws], axis=1).astype(jnp.bfloat16)   # (in, 2H)
    b1s = jnp.concatenate([b1, bs], axis=1)                        # (1, 2H)
    alphas = jnp.full((1, 3), 0.25, jnp.float32)
    params = (w1s, b1s, w2.astype(jnp.bfloat16), b2,
              w3.astype(jnp.bfloat16), b3, alphas)
    return params, key


# ----------------------------------------------------------------------------
# Model forward (glue in plain JAX, compute in the two Pallas kernels above).
# ----------------------------------------------------------------------------
def model_forward(adj, diff, feat, mask, params):
    del mask  # unused in the reference forward as well
    h_all, g_all = gcn_forward_dual(feat, adj, diff,
                                    params["gnn1"], params["gnn2"])
    _, B, N, H = h_all.shape
    # Shared-weight MLP calls merged: run both branches through one kernel.
    lv = mlp_apply(h_all.reshape(2 * B * N, H), params["mlp1"]).reshape(2, B, N, -1)
    gv = mlp_apply(g_all.reshape(2 * B, -1), params["mlp2"]).reshape(2, B, -1)
    return lv[0], gv[0], lv[1], gv[1]


# ----------------------------------------------------------------------------
# Pure-jnp reference (mirrors the kernels' bf16-input / f32-accum precision
# and the layer-1 reassociation, so the check is a tight apples-to-apples).
# ----------------------------------------------------------------------------
def _ref_gcn(feat, adj, gp, num_layers):
    w1, wr, b, alpha = gp
    F = feat.shape[-1]
    H = w1.shape[-1]
    a = adj.astype(jnp.bfloat16)
    h = feat.astype(jnp.bfloat16)
    sums = []
    o = None
    for l in range(num_layers):
        w = w1 if l == 0 else wr[l - 1]
        in_ft = F if l == 0 else H
        if in_ft < H:
            t = jnp.einsum("bnm,bmf->bnf", a, h,
                           preferred_element_type=jnp.float32)
            o = jnp.einsum("bnf,fh->bnh", t.astype(jnp.bfloat16), w,
                           preferred_element_type=jnp.float32)
        else:
            t = jnp.einsum("bnf,fh->bnh", h, w,
                           preferred_element_type=jnp.float32)
            o = jnp.einsum("bnm,bmh->bnh", a, t.astype(jnp.bfloat16),
                           preferred_element_type=jnp.float32)
        o = o + b[l][None, None, :]
        o = jnp.where(o > 0, o, alpha[l] * o)
        sums.append(jnp.sum(o, axis=1))
        h = o.astype(jnp.bfloat16)
    return o, jnp.concatenate(sums, axis=-1)


def _ref_mlp(x, p):
    w1s, b1s, w2, b2, w3, b3, al = p
    H = w2.shape[0]
    w1, ws = w1s[:, :H], w1s[:, H:]
    b1, bs = b1s[:, :H], b1s[:, H:]
    xb = x.astype(jnp.bfloat16)
    h = jnp.dot(xb, w1, preferred_element_type=jnp.float32) + b1
    h = jnp.where(h > 0, h, al[0, 0] * h)
    h = jnp.dot(h.astype(jnp.bfloat16), w2, preferred_element_type=jnp.float32) + b2
    h = jnp.where(h > 0, h, al[0, 1] * h)
    h = jnp.dot(h.astype(jnp.bfloat16), w3, preferred_element_type=jnp.float32) + b3
    h = jnp.where(h > 0, h, al[0, 2] * h)
    sc = jnp.dot(xb, ws, preferred_element_type=jnp.float32) + bs
    return h + sc


def _ref_model(adj, diff, feat, params, num_layers):
    lv1, gv1 = _ref_gcn(feat, adj, params["gnn1"], num_layers)
    lv2, gv2 = _ref_gcn(feat, diff, params["gnn2"], num_layers)
    B, N, H = lv1.shape
    lv1 = _ref_mlp(lv1.reshape(B * N, H), params["mlp1"]).reshape(B, N, -1)
    lv2 = _ref_mlp(lv2.reshape(B * N, H), params["mlp1"]).reshape(B, N, -1)
    gv1 = _ref_mlp(gv1, params["mlp2"])
    gv2 = _ref_mlp(gv2, params["mlp2"])
    return lv1, gv1, lv2, gv2


if __name__ == "__main__":
    B, N, n_in, n_h, num_layers = 2, 16, 8, 32, 2

    key = jax.random.PRNGKey(0)
    key, kf, ka, kd = jax.random.split(key, 4)
    feat = jax.random.normal(kf, (B, N, n_in), jnp.float32)
    adj = jax.random.uniform(ka, (B, N, N), jnp.float32)
    diff = jax.random.uniform(kd, (B, N, N), jnp.float32)
    mask = jnp.ones((B, N), jnp.float32)

    gnn1, key = make_gcn_params(key, n_in, n_h, num_layers)
    gnn2, key = make_gcn_params(key, n_in, n_h, num_layers)
    mlp1, key = make_mlp_params(key, 1 * n_h, n_h)
    mlp2, key = make_mlp_params(key, num_layers * n_h, n_h)
    params = {"gnn1": gnn1, "gnn2": gnn2, "mlp1": mlp1, "mlp2": mlp2}

    lv1, gv1, lv2, gv2 = model_forward(adj, diff, feat, mask, params)
    jax.block_until_ready((lv1, gv1, lv2, gv2))

    # Sanity check against a pure-jnp reference with matching precision.
    r1, rg1, r2, rg2 = _ref_model(adj, diff, feat, params, num_layers)
    for got, want in [(lv1, r1), (gv1, rg1), (lv2, r2), (gv2, rg2)]:
        assert got.shape == want.shape, (got.shape, want.shape)
        assert jnp.allclose(got, want, atol=1e-2, rtol=1e-2), \
            float(jnp.max(jnp.abs(got - want)))

    print("KERNEL_OK")
</pallas_src>

<mosaic_0001>
module attributes {stable_mosaic.version = 11 : i64} {
  func.func @gcn_fused_kernel(%arg0: i32, %arg1: i32, %arg2: memref<1x16x8xf32, #tpu.memory_space<vmem>>, %arg3: memref<1x1x16x16xf32, #tpu.memory_space<vmem>>, %arg4: memref<1x8x32xbf16, #tpu.memory_space<vmem>>, %arg5: memref<1x1x32x32xbf16, #tpu.memory_space<vmem>>, %arg6: memref<1x2x32xf32, #tpu.memory_space<vmem>>, %arg7: memref<2x2xf32, #tpu.memory_space<smem>>, %arg8: memref<1x1x16x32xf32, #tpu.memory_space<vmem>>, %arg9: memref<1x1x1x64xf32, #tpu.memory_space<vmem>>) attributes {dimension_semantics = [#tpu.dimension_semantics<parallel>, #tpu.dimension_semantics<parallel>], iteration_bounds = array<i64: 2, 2>, scalar_prefetch = 0 : i64, scratch_operands = 0 : i64, tpu.core_type = #tpu.core_type<tc>, window_params = [{transform_indices = @transform_0, window_bounds = array<i64: 1, 16, 8>}, {transform_indices = @transform_1, window_bounds = array<i64: 1, 1, 16, 16>}, {transform_indices = @transform_2, window_bounds = array<i64: 1, 8, 32>}, {transform_indices = @transform_3, window_bounds = array<i64: 1, 1, 32, 32>}, {transform_indices = @transform_4, window_bounds = array<i64: 1, 2, 32>}, {transform_indices = @transform_5, window_bounds = array<i64: 2, 2>}, {transform_indices = @transform_6, window_bounds = array<i64: 1, 1, 16, 32>}, {transform_indices = @transform_7, window_bounds = array<i64: 1, 1, 1, 64>}]} {
    %c0 = arith.constant 0 : index
    %c0_0 = arith.constant 0 : index
    %c0_1 = arith.constant 0 : index
    %c0_2 = arith.constant 0 : index
    %0 = vector.load %arg3[%c0, %c0_0, %c0_1, %c0_2] : memref<1x1x16x16xf32, #tpu.memory_space<vmem>>, vector<1x1x16x16xf32>
    %1 = vector.shape_cast %0 : vector<1x1x16x16xf32> to vector<16x16xf32>
    %2 = arith.truncf %1 : vector<16x16xf32> to vector<16x16xbf16>
    %c0_3 = arith.constant 0 : index
    %c0_4 = arith.constant 0 : index
    %c0_5 = arith.constant 0 : index
    %3 = vector.load %arg2[%c0_3, %c0_4, %c0_5] : memref<1x16x8xf32, #tpu.memory_space<vmem>>, vector<1x16x8xf32>
    %4 = vector.shape_cast %3 : vector<1x16x8xf32> to vector<16x8xf32>
    %5 = arith.truncf %4 : vector<16x8xf32> to vector<16x8xbf16>
    %c0_6 = arith.constant 0 : index
    %c0_7 = arith.constant 0 : index
    %c0_8 = arith.constant 0 : index
    %6 = vector.load %arg6[%c0_6, %c0_7, %c0_8] : memref<1x2x32xf32, #tpu.memory_space<vmem>>, vector<1x2x32xf32>
    %7 = vector.shape_cast %6 : vector<1x2x32xf32> to vector<2x32xf32>
    %c0_9 = arith.constant 0 : index
    %c0_10 = arith.constant 0 : index
    %c0_11 = arith.constant 0 : index
    %8 = vector.load %arg4[%c0_9, %c0_10, %c0_11] : memref<1x8x32xbf16, #tpu.memory_space<vmem>>, vector<1x8x32xbf16>
    %9 = vector.shape_cast %8 : vector<1x8x32xbf16> to vector<8x32xbf16>
    %cst = arith.constant dense<0.000000e+00> : vector<16x8xf32>
    %10 = tpu.matmul %2, %5, %cst {dimension_numbers = #tpu.dot_dimension_numbers<[1], [0], [0], [1], [0, 0, 1, 1], [], []>} : vector<16x16xbf16>, vector<16x8xbf16>, vector<16x8xf32> -> vector<16x8xf32>
    %11 = arith.truncf %10 : vector<16x8xf32> to vector<16x8xbf16>
    %cst_12 = arith.constant dense<0.000000e+00> : vector<16x32xf32>
    %12 = tpu.matmul %11, %9, %cst_12 {dimension_numbers = #tpu.dot_dimension_numbers<[1], [0], [0], [1], [0, 0, 1, 1], [], []>} : vector<16x8xbf16>, vector<8x32xbf16>, vector<16x32xf32> -> vector<16x32xf32>
    %13 = vector.extract_strided_slice %7 {offsets = [0, 0], sizes = [1, 32], strides = [1, 1]} : vector<2x32xf32> to vector<1x32xf32>
    %14 = vector.broadcast %13 : vector<1x32xf32> to vector<16x32xf32>
    %15 = arith.addf %12, %14 : vector<16x32xf32>
    %16 = arith.index_cast %arg0 : i32 to index
    %c0_13 = arith.constant 0 : index
    %17 = memref.load %arg7[%16, %c0_13] : memref<2x2xf32, #tpu.memory_space<smem>>
    %cst_14 = arith.constant 0.000000e+00 : f32
    %18 = vector.broadcast %cst_14 : f32 to vector<16x32xf32>
    %19 = arith.cmpf ogt, %15, %18 : vector<16x32xf32>
    %20 = vector.broadcast %17 : f32 to vector<16x32xf32>
    %21 = arith.mulf %20, %15 : vector<16x32xf32>
    %22 = arith.select %19, %15, %21 : vector<16x32xi1>, vector<16x32xf32>
    %cst_15 = arith.constant dense<0.000000e+00> : vector<32xf32>
    %23 = vector.multi_reduction <add>, %22, %cst_15 [0] : vector<16x32xf32> to vector<32xf32>
    %24 = vector.shape_cast %23 : vector<32xf32> to vector<1x32xf32>
    %25 = arith.truncf %22 : vector<16x32xf32> to vector<16x32xbf16>
    %c0_16 = arith.constant 0 : index
    %c0_17 = arith.constant 0 : index
    %c0_18 = arith.constant 0 : index
    %c0_19 = arith.constant 0 : index
    %26 = vector.load %arg5[%c0_16, %c0_17, %c0_18, %c0_19] : memref<1x1x32x32xbf16, #tpu.memory_space<vmem>>, vector<1x1x32x32xbf16>
    %27 = vector.shape_cast %26 : vector<1x1x32x32xbf16> to vector<32x32xbf16>
    %cst_20 = arith.constant dense<0.000000e+00> : vector<16x32xf32>
    %28 = tpu.matmul %25, %27, %cst_20 {dimension_numbers = #tpu.dot_dimension_numbers<[1], [0], [0], [1], [0, 0, 1, 1], [], []>} : vector<16x32xbf16>, vector<32x32xbf16>, vector<16x32xf32> -> vector<16x32xf32>
    %29 = arith.truncf %28 : vector<16x32xf32> to vector<16x32xbf16>
    %cst_21 = arith.constant dense<0.000000e+00> : vector<16x32xf32>
    %30 = tpu.matmul %2, %29, %cst_21 {dimension_numbers = #tpu.dot_dimension_numbers<[1], [0], [0], [1], [0, 0, 1, 1], [], []>} : vector<16x16xbf16>, vector<16x32xbf16>, vector<16x32xf32> -> vector<16x32xf32>
    %31 = vector.extract_strided_slice %7 {offsets = [1, 0], sizes = [1, 32], strides = [1, 1]} : vector<2x32xf32> to vector<1x32xf32>
    %32 = vector.broadcast %31 : vector<1x32xf32> to vector<16x32xf32>
    %33 = arith.addf %30, %32 : vector<16x32xf32>
    %34 = arith.index_cast %arg0 : i32 to index
    %c1 = arith.constant 1 : index
    %35 = memref.load %arg7[%34, %c1] : memref<2x2xf32, #tpu.memory_space<smem>>
    %cst_22 = arith.constant 0.000000e+00 : f32
    %36 = vector.broadcast %cst_22 : f32 to vector<16x32xf32>
    %37 = arith.cmpf ogt, %33, %36 : vector<16x32xf32>
    %38 = vector.broadcast %35 : f32 to vector<16x32xf32>
    %39 = arith.mulf %38, %33 : vector<16x32xf32>
    %40 = arith.select %37, %33, %39 : vector<16x32xi1>, vector<16x32xf32>
    %cst_23 = arith.constant dense<0.000000e+00> : vector<32xf32>
    %41 = vector.multi_reduction <add>, %40, %cst_23 [0] : vector<16x32xf32> to vector<32xf32>
    %42 = vector.shape_cast %41 : vector<32xf32> to vector<1x32xf32>
    %c0_24 = arith.constant 0 : index
    %c0_25 = arith.constant 0 : index
    %c0_26 = arith.constant 0 : index
    %c0_27 = arith.constant 0 : index
    %43 = vector.load %arg8[%c0_24, %c0_25, %c0_26, %c0_27] : memref<1x1x16x32xf32, #tpu.memory_space<vmem>>, vector<1x1x16x32xf32>
    %44 = vector.shape_cast %43 : vector<1x1x16x32xf32> to vector<16x32xf32>
    %45 = vector.shape_cast %40 : vector<16x32xf32> to vector<1x1x16x32xf32>
    tpu.vector_store %arg8[%c0_24, %c0_25, %c0_26, %c0_27], %45 {strides = array<i32>} : memref<1x1x16x32xf32, #tpu.memory_space<vmem>>, vector<1x1x16x32xf32>,
    %46 = tpu.concatenate %24, %42 in 1 : vector<1x32xf32>, vector<1x32xf32> -> vector<1x64xf32>
    %c0_28 = arith.constant 0 : index
    %c0_29 = arith.constant 0 : index
    %c0_30 = arith.constant 0 : index
    %c0_31 = arith.constant 0 : index
    %47 = vector.load %arg9[%c0_28, %c0_29, %c0_30, %c0_31] : memref<1x1x1x64xf32, #tpu.memory_space<vmem>>, vector<1x1x1x64xf32>
    %48 = vector.shape_cast %47 : vector<1x1x1x64xf32> to vector<1x64xf32>
    %49 = vector.shape_cast %46 : vector<1x64xf32> to vector<1x1x1x64xf32>
    tpu.vector_store %arg9[%c0_28, %c0_29, %c0_30, %c0_31], %49 {strides = array<i32>} : memref<1x1x1x64xf32, #tpu.memory_space<vmem>>, vector<1x1x1x64xf32>,
    return
  }
  func.func @transform_0(%arg0: i32, %arg1: i32) -> (i32, i32, i32) {
    %c0_i32 = arith.constant 0 : i32
    %c0_i32_0 = arith.constant 0 : i32
    %c0_i32_1 = arith.constant 0 : i32
    return %arg1, %c0_i32, %c0_i32_0 : i32, i32, i32
  }
  func.func @transform_1(%arg0: i32, %arg1: i32) -> (i32, i32, i32, i32) {
    %c0_i32 = arith.constant 0 : i32
    %c0_i32_0 = arith.constant 0 : i32
    %c0_i32_1 = arith.constant 0 : i32
    return %arg0, %arg1, %c0_i32, %c0_i32_0 : i32, i32, i32, i32
  }
  func.func @transform_2(%arg0: i32, %arg1: i32) -> (i32, i32, i32) {
    %c0_i32 = arith.constant 0 : i32
    %c0_i32_0 = arith.constant 0 : i32
    %c0_i32_1 = arith.constant 0 : i32
    return %arg0, %c0_i32, %c0_i32_0 : i32, i32, i32
  }
  func.func @transform_3(%arg0: i32, %arg1: i32) -> (i32, i32, i32, i32) {
    %c0_i32 = arith.constant 0 : i32
    %c0_i32_0 = arith.constant 0 : i32
    %c0_i32_1 = arith.constant 0 : i32
    %c0_i32_2 = arith.constant 0 : i32
    return %arg0, %c0_i32, %c0_i32_0, %c0_i32_1 : i32, i32, i32, i32
  }
  func.func @transform_4(%arg0: i32, %arg1: i32) -> (i32, i32, i32) {
    %c0_i32 = arith.constant 0 : i32
    %c0_i32_0 = arith.constant 0 : i32
    %c0_i32_1 = arith.constant 0 : i32
    return %arg0, %c0_i32, %c0_i32_0 : i32, i32, i32
  }
  func.func @transform_5(%arg0: i32, %arg1: i32) -> (i32, i32) {
    %c0_i32 = arith.constant 0 : i32
    %c0_i32_0 = arith.constant 0 : i32
    %c0_i32_1 = arith.constant 0 : i32
    return %c0_i32, %c0_i32_0 : i32, i32
  }
  func.func @transform_6(%arg0: i32, %arg1: i32) -> (i32, i32, i32, i32) {
    %c0_i32 = arith.constant 0 : i32
    %c0_i32_0 = arith.constant 0 : i32
    %c0_i32_1 = arith.constant 0 : i32
    return %arg0, %arg1, %c0_i32, %c0_i32_0 : i32, i32, i32, i32
  }
  func.func @transform_7(%arg0: i32, %arg1: i32) -> (i32, i32, i32, i32) {
    %c0_i32 = arith.constant 0 : i32
    %c0_i32_0 = arith.constant 0 : i32
    %c0_i32_1 = arith.constant 0 : i32
    return %arg0, %arg1, %c0_i32, %c0_i32_0 : i32, i32, i32, i32
  }
}

</mosaic_0001>

<llo_original>
// kernel: tpu_custom_call.1
$region0: #{tpu_custom_call.1}
  #allocation0 [shape = 'u32[]', space=smem, size = 0x4, offset = 0x4, fixed_abs, tag = 'smem constant byte address 0x4 - core index']
  #allocation1 [shape = 'u32[144,128]{1,0:T(1,128)}', space=vmem, size = 0x12000, scoped, tag = 'internal scratch']
  %s0 = inlined_call_operand.vmem [shape: f32[2,16,8], index: 0, kind: input, shape index: {}]
  %s1 = inlined_call_operand.hbm [shape: f32[2,2,16,16], index: 1, kind: input, shape index: {}]
  %s2 = inlined_call_operand.vmem [shape: bf16[2,8,32], index: 2, kind: input, shape index: {}]
  %s3 = inlined_call_operand.vmem [shape: bf16[2,1,32,32], index: 3, kind: input, shape index: {}]
  %s4 = inlined_call_operand.vmem [shape: f32[2,2,32], index: 4, kind: input, shape index: {}]
  %s5 = inlined_call_operand.vmem [shape: f32[2,2], index: 5, kind: input, shape index: {}]
  %s6 = inlined_call_operand.hbm [shape: f32[2,2,16,32], index: 6, kind: output, shape index: {0}]
  %s7 = inlined_call_operand.hbm [shape: f32[2,2,1,64], index: 7, kind: output, shape index: {1}]
  %8 = xla_tuple %s6, %s7
  %s9 = sld [smem:[#allocation0]]
  $region73: #{tpu_custom_call.1} parent=0
    _
  %s11 = ssub.s32 1, %s9
  %s12 = scalar_select 0, %s11, %s9
  $region1: #{tpu_custom_call.1} parent=0
    #allocation2 [shape = 'u8[16384]{0}', space=vmem, size = 0x4000, scoped, tag = 'input window, operand 1']
    #allocation3 [shape = 's32[2]{0}', space=sflag, size = 0x8, scoped, tag = 'scoped memory for tpu_custom_call.1']
    #allocation4 [shape = 's32[2]{0}', space=sflag, size = 0x8, scoped, tag = 'scoped memory for tpu_custom_call.1']
    #allocation5 [shape = 's32[2]{0}', space=sflag, size = 0x8, scoped, tag = 'scoped memory for tpu_custom_call.1']
    #allocation6 [shape = 'u8[1024]{0}', space=smem, size = 0x400, scoped, tag = 'input window, operand 5, single buffered']
    #allocation7 [shape = 'u8[16384]{0}', space=vmem, size = 0x4000, scoped, tag = 'output window, operand 0']
    #allocation8 [shape = 'u8[1024]{0}', space=vmem, size = 0x400, scoped, tag = 'output window, operand 1']
    #allocation9 [shape = 's32[2]{0}', space=sflag, size = 0x8, scoped, tag = 'scoped memory for tpu_custom_call.1']
    %13 = vsyncpa [#allocation3], 0
    %s14 = scalar_lea.sflag [#allocation3], 1
    %15 = vsyncpa %s14, 0
    %16 = vsyncpa [#allocation5], 0
    %17 = vsyncpa [#allocation4], 0
    %s18 = scalar_lea.sflag [#allocation4], 1
    %19 = vsyncpa %s18, 0
    %20 = vsyncpa [#allocation9], 0
    %s21 = scalar_lea.sflag [#allocation9], 1
    %22 = vsyncpa %s21, 0
    loop: start=0, step=1, limit=6
    $region2: #{tpu_custom_call.1} parent=1 // loop_pre_header
      _
    $region3: #{tpu_custom_call.1} parent=1 // loop_header
      %s24 = sphi 0, %s28
      %p25 = scmp.ge.s32.totalorder %s24, 6
      %s31 = sphi 0, %s43
      %s32 = sphi 0, %s39
      %s33 = sphi 0, %s31
      %s34 = sphi 0, %s32
      %s35 = sphi 0, %s33
      %s36 = sphi 0, %s34
      %s46 = sphi 0, %s48
      %s49 = sphi 0, %s46
      %s50 = sphi 0, %s49
      %s66 = sphi 0, %s50
      %s74 = sphi 0, %s76
      %s77 = sphi 0, %s74
      %s78 = sphi 0, %s77
      %s94 = sphi 0, %s78
      %s100 = sphi 0, %s102
      %s103 = sphi 0, %s100
      %s104 = sphi 0, %s103
      %s120 = sphi 0, %s104
      %s126 = sphi 0, %s128
      %s129 = sphi 0, %s126
      %s130 = sphi 0, %s129
      %s146 = sphi 0, %s130
      %s152 = sphi 0, %s154
      %s155 = sphi 0, %s152
      %s156 = sphi 0, %s155
      %s172 = sphi 0, %s156
      %s176 = sphi 0, %s176
      %s178 = sphi 0, %s176
      %s179 = sphi 0, %s178
      %s193 = sphi 0, %s179
      %s201 = sphi 0, %s203
      %s204 = sphi 0, %s201
      %s205 = sphi 0, %s204
      %s221 = sphi 0, %s205
      %s229 = sphi 0, %s231
      %s232 = sphi 0, %s229
      %s233 = sphi 0, %s232
      %s249 = sphi 0, %s233
    $region4: #{tpu_custom_call.1} parent=1 // loop_header_branch
      %27 = sbr.rel (%p25) target = $region8
    $region5: #{tpu_custom_call.1} parent=1 // loop_body
      %s29 = ssub.s32 %s24, 1
      %s30 = ssub.s32 %s24, 2
      %s37 = sadd.s32 1, %s32
      %p38 = scmp.ge.s32.totalorder %s37, 2
      %s39 = scalar_select %p38, 0, %s37
      %s40 = sadd.s32 1, %s31
      %s41 = scalar_select %p38, %s40, %s31
      %p42 = scmp.ge.s32.totalorder %s41, 2
      %s43 = scalar_select %p42, 0, %s41
      %s44 = ssub.s32 %s32, %s39
      %p45 = scmp.eq.s32.totalorder %s44, 0
      %s47 = sadd.s32 %s46, 1
      %s48 = scalar_select %p45, %s46, %s47
      %p51 = pneg %p45
      %p52 = scmp.eq.s32.totalorder %s24, 3
      %p53 = por %p51, %p52
      %p54 = scmp.ne.s32.totalorder %s46, %s49
      %p55 = scmp.eq.s32.totalorder %s24, 0
      %p56 = por %p54, %p55
      %p57 = scmp.ne.s32.totalorder %s46, %s49
      %p58 = scmp.eq.s32.totalorder %s29, 3
      %p59 = por %p57, %p58
      %p60 = scmp.ne.s32.totalorder %s49, %s50
      %p61 = scmp.eq.s32.totalorder %s29, 0
      %p62 = por %p60, %p61
      %p63 = scmp.ne.s32.totalorder %s49, %s50
      %p64 = scmp.eq.s32.totalorder %s30, 3
      %p65 = por %p63, %p64
      %p67 = scmp.ne.s32.totalorder %s50, %s66
      %p68 = scmp.eq.s32.totalorder %s30, 0
      %p69 = por %p67, %p68
      %s70 = ssub.s32 %s31, %s43
      %s71 = ssub.s32 %s32, %s39
      %s72 = sor.u32 %s70, %s71
      %p73 = scmp.eq.s32.totalorder %s72, 0
      %s75 = sadd.s32 %s74, 1
      %s76 = scalar_select %p73, %s74, %s75
      %p79 = pneg %p73
      %p80 = scmp.eq.s32.totalorder %s24, 3
      %p81 = por %p79, %p80
      %p82 = scmp.ne.s32.totalorder %s74, %s77
      %p83 = scmp.eq.s32.totalorder %s24, 0
      %p84 = por %p82, %p83
      %p85 = scmp.ne.s32.totalorder %s74, %s77
      %p86 = scmp.eq.s32.totalorder %s29, 3
      %p87 = por %p85, %p86
      %p88 = scmp.ne.s32.totalorder %s77, %s78
      %p89 = scmp.eq.s32.totalorder %s29, 0
      %p90 = por %p88, %p89
      %p91 = scmp.ne.s32.totalorder %s77, %s78
      %p92 = scmp.eq.s32.totalorder %s30, 3
      %p93 = por %p91, %p92
      %p95 = scmp.ne.s32.totalorder %s78, %s94
      %p96 = scmp.eq.s32.totalorder %s30, 0
      %p97 = por %p95, %p96
      %s98 = ssub.s32 %s31, %s43
      %p99 = scmp.eq.s32.totalorder %s98, 0
      %s101 = sadd.s32 %s100, 1
      %s102 = scalar_select %p99, %s100, %s101
      %p105 = pneg %p99
      %p106 = scmp.eq.s32.totalorder %s24, 3
      %p107 = por %p105, %p106
      %p108 = scmp.ne.s32.totalorder %s100, %s103
      %p109 = scmp.eq.s32.totalorder %s24, 0
      %p110 = por %p108, %p109
      %p111 = scmp.ne.s32.totalorder %s100, %s103
      %p112 = scmp.eq.s32.totalorder %s29, 3
      %p113 = por %p111, %p112
      %p114 = scmp.ne.s32.totalorder %s103, %s104
      %p115 = scmp.eq.s32.totalorder %s29, 0
      %p116 = por %p114, %p115
      %p117 = scmp.ne.s32.totalorder %s103, %s104
      %p118 = scmp.eq.s32.totalorder %s30, 3
      %p119 = por %p117, %p118
      %p121 = scmp.ne.s32.totalorder %s104, %s120
      %p122 = scmp.eq.s32.totalorder %s30, 0
      %p123 = por %p121, %p122
      %s124 = ssub.s32 %s31, %s43
      %p125 = scmp.eq.s32.totalorder %s124, 0
      %s127 = sadd.s32 %s126, 1
      %s128 = scalar_select %p125, %s126, %s127
      %p131 = pneg %p125
      %p132 = scmp.eq.s32.totalorder %s24, 3
      %p133 = por %p131, %p132
      %p134 = scmp.ne.s32.totalorder %s126, %s129
      %p135 = scmp.eq.s32.totalorder %s24, 0
      %p136 = por %p134, %p135
      %p137 = scmp.ne.s32.totalorder %s126, %s129
      %p138 = scmp.eq.s32.totalorder %s29, 3
      %p139 = por %p137, %p138
      %p140 = scmp.ne.s32.totalorder %s129, %s130
      %p141 = scmp.eq.s32.totalorder %s29, 0
      %p142 = por %p140, %p141
      %p143 = scmp.ne.s32.totalorder %s129, %s130
      %p144 = scmp.eq.s32.totalorder %s30, 3
      %p145 = por %p143, %p144
      %p147 = scmp.ne.s32.totalorder %s130, %s146
      %p148 = scmp.eq.s32.totalorder %s30, 0
      %p149 = por %p147, %p148
      %s150 = ssub.s32 %s31, %s43
      %p151 = scmp.eq.s32.totalorder %s150, 0
      %s153 = sadd.s32 %s152, 1
      %s154 = scalar_select %p151, %s152, %s153
      %p157 = pneg %p151
      %p158 = scmp.eq.s32.totalorder %s24, 3
      %p159 = por %p157, %p158
      %p160 = scmp.ne.s32.totalorder %s152, %s155
      %p161 = scmp.eq.s32.totalorder %s24, 0
      %p162 = por %p160, %p161
      %p163 = scmp.ne.s32.totalorder %s152, %s155
      %p164 = scmp.eq.s32.totalorder %s29, 3
      %p165 = por %p163, %p164
      %p166 = scmp.ne.s32.totalorder %s155, %s156
      %p167 = scmp.eq.s32.totalorder %s29, 0
      %p168 = por %p166, %p167
      %p169 = scmp.ne.s32.totalorder %s155, %s156
      %p170 = scmp.eq.s32.totalorder %s30, 3
      %p171 = por %p169, %p170
      %p173 = scmp.ne.s32.totalorder %s156, %s172
      %p174 = scmp.eq.s32.totalorder %s30, 0
      %p175 = por %p173, %p174
      %s177 = sadd.s32 %s176, 1
      %p180 = scmp.eq.s32.totalorder %s24, 3
      %p181 = scmp.ne.s32.totalorder %s176, %s178
      %p182 = scmp.eq.s32.totalorder %s24, 0
      %p183 = por %p181, %p182
      %p184 = scmp.ne.s32.totalorder %s176, %s178
      %p185 = scmp.eq.s32.totalorder %s29, 3
      %p186 = por %p184, %p185
      %p187 = scmp.ne.s32.totalorder %s178, %s179
      %p188 = scmp.eq.s32.totalorder %s29, 0
      %p189 = por %p187, %p188
      %p190 = scmp.ne.s32.totalorder %s178, %s179
      %p191 = scmp.eq.s32.totalorder %s30, 3
      %p192 = por %p190, %p191
      %p194 = scmp.ne.s32.totalorder %s179, %s193
      %p195 = scmp.eq.s32.totalorder %s30, 0
      %p196 = por %p194, %p195
      %s197 = ssub.s32 %s31, %s43
      %s198 = ssub.s32 %s32, %s39
      %s199 = sor.u32 %s197, %s198
      %p200 = scmp.eq.s32.totalorder %s199, 0
      %s202 = sadd.s32 %s201, 1
      %s203 = scalar_select %p200, %s201, %s202
      %p206 = pneg %p200
      %p207 = scmp.eq.s32.totalorder %s24, 3
      %p208 = por %p206, %p207
      %p209 = scmp.ne.s32.totalorder %s201, %s204
      %p210 = scmp.eq.s32.totalorder %s24, 0
      %p211 = por %p209, %p210
      %p212 = scmp.ne.s32.totalorder %s201, %s204
      %p213 = scmp.eq.s32.totalorder %s29, 3
      %p214 = por %p212, %p213
      %p215 = scmp.ne.s32.totalorder %s204, %s205
      %p216 = scmp.eq.s32.totalorder %s29, 0
      %p217 = por %p215, %p216
      %p218 = scmp.ne.s32.totalorder %s204, %s205
      %p219 = scmp.eq.s32.totalorder %s30, 3
      %p220 = por %p218, %p219
      %p222 = scmp.ne.s32.totalorder %s205, %s221
      %p223 = scmp.eq.s32.totalorder %s30, 0
      %p224 = por %p222, %p223
      %s225 = ssub.s32 %s31, %s43
      %s226 = ssub.s32 %s32, %s39
      %s227 = sor.u32 %s225, %s226
      %p228 = scmp.eq.s32.totalorder %s227, 0
      %s230 = sadd.s32 %s229, 1
      %s231 = scalar_select %p228, %s229, %s230
      %p234 = pneg %p228
      %p235 = scmp.eq.s32.totalorder %s24, 3
      %p236 = por %p234, %p235
      %p237 = scmp.ne.s32.totalorder %s229, %s232
      %p238 = scmp.eq.s32.totalorder %s24, 0
      %p239 = por %p237, %p238
      %p240 = scmp.ne.s32.totalorder %s229, %s232
      %p241 = scmp.eq.s32.totalorder %s29, 3
      %p242 = por %p240, %p241
      %p243 = scmp.ne.s32.totalorder %s232, %s233
      %p244 = scmp.eq.s32.totalorder %s29, 0
      %p245 = por %p243, %p244
      %p246 = scmp.ne.s32.totalorder %s232, %s233
      %p247 = scmp.eq.s32.totalorder %s30, 3
      %p248 = por %p246, %p247
      %p250 = scmp.ne.s32.totalorder %s233, %s249
      %p251 = scmp.eq.s32.totalorder %s30, 0
      %p252 = por %p250, %p251
      %p253 = scmp.le.s32.totalorder 1, %s24
      %p254 = scmp.lt.s32.totalorder %s24, 5
      %p255 = pnand %p253, %p254
      %p256 = pneg %p255
      // Predicated region
      $region9: #{tpu_custom_call.1} parent=5 // pred_check
        _
      $region10: #{tpu_custom_call.1} parent=5 // pred_check_branch
        %258 = sbr.rel (%p255) target = $region12
      $region11: #{tpu_custom_call.1} parent=5 // pred_region
        %s259 = ssub.s32 %s24, 1
        // Predicated region
        $region13: #{tpu_custom_call.1} parent=11 // pred_check
          %p260 = pneg %p189
        $region14: #{tpu_custom_call.1} parent=11 // pred_check_branch
          %262 = sbr.rel (%p260) target = $region16
        $region15: #{tpu_custom_call.1} parent=11 // pred_region
          %s264 = ssub.s32 32, 32
          %265 = vsyncadd [#allocation5], %s264
          %s267 = sshll.u32 %s5, 4
          %s268 = int_to_ptr.vmem [resolvable:$true] %s267
          %270 = dma.vmem_to_smem %s268, 32, [#allocation6], [#allocation5]
        $region16: #{tpu_custom_call.1} parent=11 // pred_fallthru
          _
      $region12: #{tpu_custom_call.1} parent=5 // pred_fallthru
        _
      %p271 = scmp.lt.s32.totalorder %s24, 4
      // Predicated region
      $region17: #{tpu_custom_call.1} parent=5 // pred_check
        %p272 = pneg %p271
      $region18: #{tpu_custom_call.1} parent=5 // pred_check_branch
        %274 = sbr.rel (%p272) target = $region20
      $region19: #{tpu_custom_call.1} parent=5 // pred_region
        // Predicated region
        $region21: #{tpu_custom_call.1} parent=19 // pred_check
          %p275 = pneg %p56
        $region22: #{tpu_custom_call.1} parent=19 // pred_check_branch
          %277 = sbr.rel (%p275) target = $region24
        $region23: #{tpu_custom_call.1} parent=19 // pred_region
          %p278 = scmp.lt.s32.totalorder %s32, 1
          %s279 = scalar_select %p278, %s32, 1
          %s280 = smul.addr %s279, 2
          %s281 = smul.addr %s280, 8
          %s282 = scalar_lea.vmem %s0, %s281
        $region24: #{tpu_custom_call.1} parent=19 // pred_fallthru
          _
        // Predicated region
        $region25: #{tpu_custom_call.1} parent=19 // pred_check
          %p283 = pneg %p84
        $region26: #{tpu_custom_call.1} parent=19 // pred_check_branch
          %285 = sbr.rel (%p283) target = $region28
        $region27: #{tpu_custom_call.1} parent=19 // pred_region
          %s286 = sand.u32 %s74, 1
          %s287 = scalar_lea.sflag [#allocation3], %s286
          %s288 = sand.u32 %s74, 1
          %s289 = smul.addr %s288, 16
          %s290 = scalar_lea.vmem [#allocation2], %s289
          %s292 = ssub.s32 256, 256
          %293 = vsyncadd %s287, %s292
          %s294 = smul.addr %s32, 2
          %s295 = smul.addr %s31, 4
          %s296 = sadd.s32 %s294, %s295
          %s297 = smul.addr %s296, 128
          %s298 = scalar_lea.hbm %s1, %s297
          %s299 = sshll.u32 %s290, 4
          %s300 = int_to_ptr.vmem [resolvable:$true] %s299
          %305 = dma.hbm_to_vmem [thread:$0]  %s298, 256, %s300, %s287, 128, 128, 8
        $region28: #{tpu_custom_call.1} parent=19 // pred_fallthru
          _
        // Predicated region
        $region29: #{tpu_custom_call.1} parent=19 // pred_check
          %p306 = pneg %p110
        $region30: #{tpu_custom_call.1} parent=19 // pred_check_branch
          %308 = sbr.rel (%p306) target = $region32
        $region31: #{tpu_custom_call.1} parent=19 // pred_region
          %p309 = scmp.lt.s32.totalorder %s31, 1
          %s310 = scalar_select %p309, %s31, 1
          %s311 = smul.addr %s310, 4
          %s312 = scalar_lea.vmem %s2, %s311
        $region32: #{tpu_custom_call.1} parent=19 // pred_fallthru
          _
        // Predicated region
        $region33: #{tpu_custom_call.1} parent=19 // pred_check
          %p313 = pneg %p136
        $region34: #{tpu_custom_call.1} parent=19 // pred_check_branch
          %315 = sbr.rel (%p313) target = $region36
        $region35: #{tpu_custom_call.1} parent=19 // pred_region
          %p316 = scmp.lt.s32.totalorder %s31, 1
          %s317 = scalar_select %p316, %s31, 1
          %s318 = smul.addr %s317, 4
          %s319 = smul.addr %s318, 4
          %s320 = scalar_lea.vmem %s3, %s319
        $region36: #{tpu_custom_call.1} parent=19 // pred_fallthru
          _
        // Predicated region
        $region37: #{tpu_custom_call.1} parent=19 // pred_check
          %p321 = pneg %p162
        $region38: #{tpu_custom_call.1} parent=19 // pred_check_branch
          %323 = sbr.rel (%p321) target = $region40
        $region39: #{tpu_custom_call.1} parent=19 // pred_region
          %p324 = scmp.lt.s32.totalorder %s31, 1
          %s325 = scalar_select %p324, %s31, 1
          %s326 = smul.addr %s325, 2
          %s327 = scalar_lea.vmem %s4, %s326
        $region40: #{tpu_custom_call.1} parent=19 // pred_fallthru
          _
      $region20: #{tpu_custom_call.1} parent=5 // pred_fallthru
        _
      %p328 = scmp.le.s32.totalorder 1, %s24
      %p329 = scmp.lt.s32.totalorder %s24, 5
      %p330 = pnand %p328, %p329
      %p331 = pneg %p330
      // Predicated region
      $region41: #{tpu_custom_call.1} parent=5 // pred_check
        _
      $region42: #{tpu_custom_call.1} parent=5 // pred_check_branch
        %333 = sbr.rel (%p330) target = $region44
      $region43: #{tpu_custom_call.1} parent=5 // pred_region
        %s334 = ssub.s32 %s24, 1
        %s335 = sand.u32 %s77, 1
        %s336 = scalar_lea.sflag [#allocation3], %s335
        %s337 = sand.u32 %s77, 1
        %s338 = smul.addr %s337, 16
        %s339 = scalar_lea.vmem [#allocation2], %s338
        // Predicated region
        $region45: #{tpu_custom_call.1} parent=43 // pred_check
          %p340 = pneg %p90
        $region46: #{tpu_custom_call.1} parent=43 // pred_check_branch
          %342 = sbr.rel (%p340) target = $region48
        $region47: #{tpu_custom_call.1} parent=43 // pred_region
          %343 = dma.done %s336, 256
        $region48: #{tpu_custom_call.1} parent=43 // pred_fallthru
          _
        // Predicated region
        $region49: #{tpu_custom_call.1} parent=43 // pred_check
          %p344 = pneg %p189
        $region50: #{tpu_custom_call.1} parent=43 // pred_check_branch
          %346 = sbr.rel (%p344) target = $region52
        $region51: #{tpu_custom_call.1} parent=43 // pred_region
          %347 = dma.done [#allocation5], 32
        $region52: #{tpu_custom_call.1} parent=43 // pred_fallthru
          _
        %348 = sfence
        %p349 = scmp.lt.s32.totalorder %s34, 1
        %s350 = scalar_select %p349, %s34, 1
        %s351 = smul.addr %s350, 2
        %s352 = smul.addr %s351, 8
        %s353 = scalar_lea.vmem %s0, %s352
        %p354 = pneg %p62
        %p355 = pneg %p59
        %s356 = sand.u32 %s77, 1
        %s357 = scalar_lea.sflag [#allocation3], %s356
        %s358 = sand.u32 %s77, 1
        %s359 = smul.addr %s358, 16
        %s360 = scalar_lea.vmem [#allocation2], %s359
        %p361 = pneg %p90
        %p362 = pneg %p87
        %p363 = scmp.lt.s32.totalorder %s33, 1
        %s364 = scalar_select %p363, %s33, 1
        %s365 = smul.addr %s364, 4
        %s366 = scalar_lea.vmem %s2, %s365
        %p367 = pneg %p116
        %p368 = pneg %p113
        %p369 = scmp.lt.s32.totalorder %s33, 1
        %s370 = scalar_select %p369, %s33, 1
        %s371 = smul.addr %s370, 4
        %s372 = smul.addr %s371, 4
        %s373 = scalar_lea.vmem %s3, %s372
        %p374 = pneg %p142
        %p375 = pneg %p139
        %p376 = scmp.lt.s32.totalorder %s33, 1
        %s377 = scalar_select %p376, %s33, 1
        %s378 = smul.addr %s377, 2
        %s379 = scalar_lea.vmem %s4, %s378
        %p380 = pneg %p168
        %p381 = pneg %p165
        %p382 = pneg %p189
        %p383 = pneg %p186
        %p384 = pneg %p217
        %p385 = pneg %p214
        %s386 = sand.u32 %s204, 1
        %s387 = scalar_lea.sflag [#allocation4], %s386
        %s388 = sand.u32 %s204, 1
        %s389 = smul.addr %s388, 16
        %s390 = scalar_lea.vmem [#allocation7], %s389
        %p391 = pneg %p245
        %p392 = pneg %p242
        %s393 = sand.u32 %s232, 1
        %s394 = scalar_lea.sflag [#allocation9], %s393
        %s395 = sand.u32 %s232, 1
        %s396 = scalar_lea.vmem [#allocation8], %s395
        %p397 = scmp.lt.s32.totalorder %s34, 1
        %s398 = scalar_select %p397, %s34, 1
        %s399 = smul.addr %s398, 2
        %s400 = smul.addr %s399, 8
        %s401 = scalar_lea.vmem %s0, %s400
        %p402 = scmp.lt.s32.totalorder %s33, 1
        %s403 = scalar_select %p402, %s33, 1
        %s404 = smul.addr %s403, 4
        %s405 = scalar_lea.vmem %s2, %s404
        %p406 = scmp.lt.s32.totalorder %s33, 1
        %s407 = scalar_select %p406, %s33, 1
        %s408 = smul.addr %s407, 4
        %s409 = smul.addr %s408, 4
        %s410 = scalar_lea.vmem %s3, %s409
        %p411 = scmp.lt.s32.totalorder %s33, 1
        %s412 = scalar_select %p411, %s33, 1
        %s413 = smul.addr %s412, 2
        %s414 = scalar_lea.vmem %s4, %s413
        %v416 = vld [vmem:[%s339] sm:$0xff]
        %v417 = vld [vmem:[%s339 + $0x8] sm:$0xff]
        %v418 = vpack.c.bf16 %v417, %v416
        %v419 = vld [vmem:[%s401] sm:$0xff]
        %v420 = vld [vmem:[%s401 + $0x8] sm:$0xff]
        %v421 = vpack.c.bf16 %v420, %v419
        %v422 = vld [vmem:[%s414] sm:$0x3]
        %v423 = vld [vmem:[%s405] sm:$0xf]
        %vm424 = vcmask 130048
        %v426 = vsel %vm424, %v418, 0
        %428 = vmatprep.subr.bf16.mxu0 0
        %429 = vmatpush1.bf16.msra.mxu0 %v421
        %430 = vmatprep.subr.bf16.mxu0 0
        %431 = vmatpush1.bf16.msra.mxu0 0
        %432 = vmatprep.subr.bf16.mxu0 0
        %433 = vmatpush1.bf16.msra.mxu0 0
        %434 = vmatprep.subr.bf16.mxu0 0
        %435 = vmatpush1.bf16.msra.mxu0 0
        %436 = vmatprep.subr.bf16.mxu0 0
        %437 = vmatpush1.bf16.msra.mxu0 0
        %438 = vmatprep.subr.bf16.mxu0 0
        %439 = vmatpush1.bf16.msra.mxu0 0
        %440 = vmatprep.subr.bf16.mxu0 0
        %441 = vmatpush1.bf16.msra.mxu0 0
        %442 = vmatprep.subr.bf16.mxu0 0
        %443 = vmatpush1.bf16.msra.mxu0 0
        %444 = vmatprep.subr.bf16.mxu0 0
        %445 = vmatpush1.bf16.msra.mxu0 0
        %446 = vmatprep.subr.bf16.mxu0 0
        %447 = vmatpush1.bf16.msra.mxu0 0
        %448 = vmatprep.subr.bf16.mxu0 0
        %449 = vmatpush1.bf16.msra.mxu0 0
        %450 = vmatprep.subr.bf16.mxu0 0
        %451 = vmatpush1.bf16.msra.mxu0 0
        %452 = vmatprep.subr.bf16.mxu0 0
        %453 = vmatpush1.bf16.msra.mxu0 0
        %454 = vmatprep.subr.bf16.mxu0 0
        %455 = vmatpush1.bf16.msra.mxu0 0
        %456 = vmatprep.subr.bf16.mxu0 0
        %457 = vmatpush1.bf16.msra.mxu0 0
        %458 = vmatprep.subr.bf16.mxu0 0
        %459 = vmatpush1.bf16.msra.mxu0 0
        %460 = vmatprep.mubr.bf16.mxu0 0
        %461 = vmatmul.mubr.bf16.gmra.mrb[0].mxu0 %v426
        %v462 = vpop.f32.mrb[0].mxu0
        %v463 = vadd.f32 0.0, %v462
        %v464 = vpop.f32.mrb[0].mxu0
        %v465 = vpop.f32.mrb[0].mxu0
        %v466 = vadd.f32 0.0, %v465
        %v467 = vpop.f32.mrb[0].mxu0
        %468 = vdwg.mxu0
        %v469 = vpack.c.bf16 %v466, %v463
        %v470 = vlaneseq
        %v471 = vshrl.u32 %v470, 7
        %v472 = vsub.s32 0, %v471
        %v473 = vrot.slane %v422, %v472
        %vm474 = vcmask 64512
        %v476 = vsel %vm474, %v469, 0
        %vm478 = vcmask 1043456
        %v480 = vsel %vm478, %v423, 0
        %482 = vmatprep.subr.bf16.mxu0 0
        %483 = vmatpush1.bf16.msra.mxu0 %v480
        %484 = vmatprep.subr.bf16.mxu0 0
        %485 = vmatpush1.bf16.msra.mxu0 0
        %486 = vmatprep.subr.bf16.mxu0 0
        %487 = vmatpush1.bf16.msra.mxu0 0
        %488 = vmatprep.subr.bf16.mxu0 0
        %489 = vmatpush1.bf16.msra.mxu0 0
        %490 = vmatprep.subr.bf16.mxu0 0
        %491 = vmatpush1.bf16.msra.mxu0 0
        %492 = vmatprep.subr.bf16.mxu0 0
        %493 = vmatpush1.bf16.msra.mxu0 0
        %494 = vmatprep.subr.bf16.mxu0 0
        %495 = vmatpush1.bf16.msra.mxu0 0
        %496 = vmatprep.subr.bf16.mxu0 0
        %497 = vmatpush1.bf16.msra.mxu0 0
        %498 = vmatprep.subr.bf16.mxu0 0
        %499 = vmatpush1.bf16.msra.mxu0 0
        %500 = vmatprep.subr.bf16.mxu0 0
        %501 = vmatpush1.bf16.msra.mxu0 0
        %502 = vmatprep.subr.bf16.mxu0 0
        %503 = vmatpush1.bf16.msra.mxu0 0
        %504 = vmatprep.subr.bf16.mxu0 0
        %505 = vmatpush1.bf16.msra.mxu0 0
        %506 = vmatprep.subr.bf16.mxu0 0
        %507 = vmatpush1.bf16.msra.mxu0 0
        %508 = vmatprep.subr.bf16.mxu0 0
        %509 = vmatpush1.bf16.msra.mxu0 0
        %510 = vmatprep.subr.bf16.mxu0 0
        %511 = vmatpush1.bf16.msra.mxu0 0
        %512 = vmatprep.subr.bf16.mxu0 0
        %513 = vmatpush1.bf16.msra.mxu0 0
        %514 = vmatprep.mubr.bf16.mxu0 0
        %515 = vmatmul.mubr.bf16.gmra.mrb[0].mxu0 %v476
        %v516 = vpop.f32.mrb[0].mxu0
        %v517 = vadd.f32 %v473, %v516
        %v518 = vpop.f32.mrb[0].mxu0
        %v519 = vpop.f32.mrb[0].mxu0
        %v520 = vadd.f32 %v473, %v519
        %v521 = vpop.f32.mrb[0].mxu0
        %522 = vdwg.mxu0
        %s523 = smul.u32 %s33, 128
        %s524 = sld [smem:[#allocation6 + %s523]]
        %vm525 = vcmp.gt.f32.partialorder %v517, 0.0
        %vm526 = vcmp.gt.f32.partialorder %v520, 0.0
        %v527 = vstv %s524
        %v528 = vmul.f32 %v527, %v517
        %v529 = vmul.f32 %v527, %v520
        %v530 = vsel %vm525, %v517, %v528
        %v531 = vsel %vm526, %v520, %v529
        %vm532 = vcmask 261120
        %v533 = vsel %vm532, %v530, 0.0
        %v534 = vsel %vm532, %v531, 0.0
        %v535 = vadd.f32 %v533, %v534
        %v536 = vrot.slane %v535, 4
        %v537 = vadd.f32 %v535, %v536
        %v538 = vrot.slane %v537, 2
        %v539 = vadd.f32 %v537, %v538
        %v540 = vrot.slane %v539, 1
        %v541 = vadd.f32 %v539, %v540
        %v542 = vpack.c.bf16 %v531, %v530
        %v543 = vld [vmem:[%s410] sm:$0xf]
        %v544 = vld [vmem:[%s410 + $0x4] sm:$0xf]
        %v545 = vld [vmem:[%s410 + $0x8] sm:$0xf]
        %v546 = vld [vmem:[%s410 + $0xc] sm:$0xf]
        %v551 = vunpack.c.l.b16 %v543
        %v552 = vunpack.c.l.b16 %v544
        %v553 = vunpack.c.l.b16 %v545
        %v554 = vunpack.c.l.b16 %v546
        %v555 = vpack.c.b16 %v552, %v551
        %v556 = vpack.c.b16 %v554, %v553
        %v560 = vsel %vm532, %v542, 0
        %562 = vmatprep.subr.bf16.mxu0 0
        %563 = vmatpush1.bf16.msra.mxu0 %v555
        %564 = vmatprep.subr.bf16.mxu0 0
        %565 = vmatpush1.bf16.msra.mxu0 %v556
        %566 = vmatprep.subr.bf16.mxu0 0
        %567 = vmatpush1.bf16.msra.mxu0 0
        %568 = vmatprep.subr.bf16.mxu0 0
        %569 = vmatpush1.bf16.msra.mxu0 0
        %570 = vmatprep.subr.bf16.mxu0 0
        %571 = vmatpush1.bf16.msra.mxu0 0
        %572 = vmatprep.subr.bf16.mxu0 0
        %573 = vmatpush1.bf16.msra.mxu0 0
        %574 = vmatprep.subr.bf16.mxu0 0
        %575 = vmatpush1.bf16.msra.mxu0 0
        %576 = vmatprep.subr.bf16.mxu0 0
        %577 = vmatpush1.bf16.msra.mxu0 0
        %578 = vmatprep.subr.bf16.mxu0 0
        %579 = vmatpush1.bf16.msra.mxu0 0
        %580 = vmatprep.subr.bf16.mxu0 0
        %581 = vmatpush1.bf16.msra.mxu0 0
        %582 = vmatprep.subr.bf16.mxu0 0
        %583 = vmatpush1.bf16.msra.mxu0 0
        %584 = vmatprep.subr.bf16.mxu0 0
        %585 = vmatpush1.bf16.msra.mxu0 0
        %586 = vmatprep.subr.bf16.mxu0 0
        %587 = vmatpush1.bf16.msra.mxu0 0
        %588 = vmatprep.subr.bf16.mxu0 0
        %589 = vmatpush1.bf16.msra.mxu0 0
        %590 = vmatprep.subr.bf16.mxu0 0
        %591 = vmatpush1.bf16.msra.mxu0 0
        %592 = vmatprep.subr.bf16.mxu0 0
        %593 = vmatpush1.bf16.msra.mxu0 0
        %594 = vmatprep.mubr.bf16.mxu0 0
        %595 = vmatmul.mubr.bf16.gmra.mrb[0].mxu0 %v560
        %v596 = vpop.f32.mrb[0].mxu0
        %v597 = vadd.f32 0.0, %v596
        %v598 = vpop.f32.mrb[0].mxu0
        %v599 = vpop.f32.mrb[0].mxu0
        %v600 = vadd.f32 0.0, %v599
        %v601 = vpop.f32.mrb[0].mxu0
        %602 = vdwg.mxu0
        %v603 = vpack.c.bf16 %v600, %v597
        %v604 = vlaneseq
        %v605 = vshrl.u32 %v604, 7
        %v606 = vsub.s32 1, %v605
        %v607 = vrot.slane %v422, %v606
        %608 = vmatprep.subr.bf16.mxu0 0
        %609 = vmatpush1.bf16.msra.mxu0 %v603
        %610 = vmatprep.subr.bf16.mxu0 0
        %611 = vmatpush1.bf16.msra.mxu0 0
        %612 = vmatprep.subr.bf16.mxu0 0
        %613 = vmatpush1.bf16.msra.mxu0 0
        %614 = vmatprep.subr.bf16.mxu0 0
        %615 = vmatpush1.bf16.msra.mxu0 0
        %616 = vmatprep.subr.bf16.mxu0 0
        %617 = vmatpush1.bf16.msra.mxu0 0
        %618 = vmatprep.subr.bf16.mxu0 0
        %619 = vmatpush1.bf16.msra.mxu0 0
        %620 = vmatprep.subr.bf16.mxu0 0
        %621 = vmatpush1.bf16.msra.mxu0 0
        %622 = vmatprep.subr.bf16.mxu0 0
        %623 = vmatpush1.bf16.msra.mxu0 0
        %624 = vmatprep.subr.bf16.mxu0 0
        %625 = vmatpush1.bf16.msra.mxu0 0
        %626 = vmatprep.subr.bf16.mxu0 0
        %627 = vmatpush1.bf16.msra.mxu0 0
        %628 = vmatprep.subr.bf16.mxu0 0
        %629 = vmatpush1.bf16.msra.mxu0 0
        %630 = vmatprep.subr.bf16.mxu0 0
        %631 = vmatpush1.bf16.msra.mxu0 0
        %632 = vmatprep.subr.bf16.mxu0 0
        %633 = vmatpush1.bf16.msra.mxu0 0
        %634 = vmatprep.subr.bf16.mxu0 0
        %635 = vmatpush1.bf16.msra.mxu0 0
        %636 = vmatprep.subr.bf16.mxu0 0
        %637 = vmatpush1.bf16.msra.mxu0 0
        %638 = vmatprep.subr.bf16.mxu0 0
        %639 = vmatpush1.bf16.msra.mxu0 0
        %640 = vmatprep.mubr.bf16.mxu0 0
        %641 = vmatmul.mubr.bf16.gmra.mrb[0].mxu0 %v426
        %v642 = vpop.f32.mrb[0].mxu0
        %v643 = vadd.f32 %v607, %v642
        %v644 = vpop.f32.mrb[0].mxu0
        %v645 = vpop.f32.mrb[0].mxu0
        %v646 = vadd.f32 %v607, %v645
        %v647 = vpop.f32.mrb[0].mxu0
        %648 = vdwg.mxu0
        %s649 = sadd.s32 %s523, 1
        %s650 = sld [smem:[#allocation6 + %s649]]
        %vm651 = vcmp.gt.f32.partialorder %v643, 0.0
        %vm652 = vcmp.gt.f32.partialorder %v646, 0.0
        %v653 = vstv %s650
        %v654 = vmul.f32 %v653, %v643
        %v655 = vmul.f32 %v653, %v646
        %v656 = vsel %vm651, %v643, %v654
        %v657 = vsel %vm652, %v646, %v655
        %v658 = vsel %vm532, %v656, 0.0
        %v659 = vsel %vm532, %v657, 0.0
        %v660 = vadd.f32 %v658, %v659
        %v661 = vrot.slane %v660, 4
        %v662 = vadd.f32 %v660, %v661
        %v663 = vrot.slane %v662, 2
        %v664 = vadd.f32 %v662, %v663
        %v665 = vrot.slane %v664, 1
        %v666 = vadd.f32 %v664, %v665
        %667 = vst.msk [vmem:[%s390] sm:$0xff] %vm532, %v656
        %668 = vst.msk [vmem:[%s390 + $0x8] sm:$0xff] %vm532, %v657
        %670 = vrot.lane.b32.xlu0 %v666, 32
        %v671 = vpop.permute.xlu0 %670
        %v673 = vsel %vm532, %v541, %v671
        %vm674 = vcmask 516096
        %675 = vst.msk [vmem:[%s396] sm:$0x1] %vm674, %v673
        %s676 = sand.u32 %s204, 1
        %s677 = scalar_lea.sflag [#allocation4], %s676
        %s678 = sand.u32 %s204, 1
        %s679 = smul.addr %s678, 16
        %s680 = scalar_lea.vmem [#allocation7], %s679
        %s681 = sand.u32 %s232, 1
        %s682 = scalar_lea.sflag [#allocation9], %s681
        %s683 = sand.u32 %s232, 1
        %s684 = scalar_lea.vmem [#allocation8], %s683
        // Predicated region
        $region53: #{tpu_custom_call.1} parent=43 // pred_check
          %p685 = pneg %p214
        $region54: #{tpu_custom_call.1} parent=43 // pred_check_branch
          %687 = sbr.rel (%p685) target = $region56
        $region55: #{tpu_custom_call.1} parent=43 // pred_region
          %s689 = ssub.s32 256, 256
          %690 = vsyncadd %s677, %s689
          %s691 = smul.addr %s34, 2
          %s692 = smul.addr %s33, 4
          %s693 = sadd.s32 %s691, %s692
          %s694 = smul.addr %s693, 128
          %s695 = scalar_lea.hbm %s6, %s694
          %s696 = sshll.u32 %s680, 4
          %s697 = int_to_ptr.vmem [resolvable:$true] %s696
          %702 = dma.vmem_to_hbm [thread:$0]  %s697, 256, %s695, %s677, 128, 128, 8
        $region56: #{tpu_custom_call.1} parent=43 // pred_fallthru
          _
        // Predicated region
        $region57: #{tpu_custom_call.1} parent=43 // pred_check
          %p703 = pneg %p242
        $region58: #{tpu_custom_call.1} parent=43 // pred_check_branch
          %705 = sbr.rel (%p703) target = $region60
        $region59: #{tpu_custom_call.1} parent=43 // pred_region
          %s707 = ssub.s32 16, 16
          %708 = vsyncadd %s682, %s707
          %s709 = smul.addr %s33, 2
          %s710 = sadd.s32 %s34, %s709
          %s711 = smul.addr %s710, 16
          %s712 = scalar_lea.hbm %s7, %s711
          %s714 = sshll.u32 %s684, 4
          %s715 = int_to_ptr.vmem [resolvable:$true] %s714
          %717 = dma.vmem_to_hbm [thread:$0]  %s715, 16, %s712, %s682
        $region60: #{tpu_custom_call.1} parent=43 // pred_fallthru
          _
      $region44: #{tpu_custom_call.1} parent=5 // pred_fallthru
        _
      %p718 = scmp.le.s32.totalorder 2, %s24
      // Predicated region
      $region61: #{tpu_custom_call.1} parent=5 // pred_check
        %p719 = pneg %p718
      $region62: #{tpu_custom_call.1} parent=5 // pred_check_branch
        %721 = sbr.rel (%p719) target = $region64
      $region63: #{tpu_custom_call.1} parent=5 // pred_region
        %s722 = ssub.s32 %s24, 2
        // Predicated region
        $region65: #{tpu_custom_call.1} parent=63 // pred_check
          %p723 = pneg %p220
        $region66: #{tpu_custom_call.1} parent=63 // pred_check_branch
          %725 = sbr.rel (%p723) target = $region68
        $region67: #{tpu_custom_call.1} parent=63 // pred_region
          %s726 = sand.u32 %s205, 1
          %s727 = scalar_lea.sflag [#allocation4], %s726
          %s728 = sand.u32 %s205, 1
          %s729 = smul.addr %s728, 16
          %s730 = scalar_lea.vmem [#allocation7], %s729
          %731 = dma.done %s727, 256
        $region68: #{tpu_custom_call.1} parent=63 // pred_fallthru
          _
        // Predicated region
        $region69: #{tpu_custom_call.1} parent=63 // pred_check
          %p732 = pneg %p248
        $region70: #{tpu_custom_call.1} parent=63 // pred_check_branch
          %734 = sbr.rel (%p732) target = $region72
        $region71: #{tpu_custom_call.1} parent=63 // pred_region
          %s735 = sand.u32 %s233, 1
          %s736 = scalar_lea.sflag [#allocation9], %s735
          %s737 = sand.u32 %s233, 1
          %s738 = scalar_lea.vmem [#allocation8], %s737
          %739 = dma.done %s736, 16
        $region72: #{tpu_custom_call.1} parent=63 // pred_fallthru
          _
      $region64: #{tpu_custom_call.1} parent=5 // pred_fallthru
        _
    $region6: #{tpu_custom_call.1} parent=1 // loop_footer
      %s28 = sadd.s32 1, %s24
    $region7: #{tpu_custom_call.1} parent=1 // loop_footer_branch
      %23 = sbr.rel target = $region3
    $region8: #{tpu_custom_call.1} parent=1 // loop_exit
      _
    %740 = vsyncpa [#allocation3], 1
    %s741 = scalar_lea.sflag [#allocation3], 1
    %742 = vsyncpa %s741, 1
    %743 = vsyncpa [#allocation4], 1
    %s744 = scalar_lea.sflag [#allocation4], 1
    %745 = vsyncpa %s744, 1
    %746 = vsyncpa [#allocation9], 1
    %s747 = scalar_lea.sflag [#allocation9], 1
    %748 = vsyncpa %s747, 1
    %749 = vsyncpa [#allocation5], 1
    %s750 = scalar_lea.sflag [#allocation5], 1
    %751 = vsyncpa %s750, 1

</llo_original>
